<compile_context>
chip_gen: v7x
topology: tpu7x:2x2x1
jax: 0.10.0
libtpu: 0.0.40
codegen_flags: <defaults>
</compile_context>

<pallas_src>
import functools

import numpy as np
import jax
import jax.numpy as jnp
from jax.experimental import pallas as pl
from jax.experimental.pallas import tpu as pltpu


# ----------------------------------------------------------------------------
# Schedule setup (numpy glue — mirrors diffuser.utils.cosine_beta_schedule)
# ----------------------------------------------------------------------------
def cosine_beta_schedule(timesteps, s=0.008):
    steps = timesteps + 1
    x = np.linspace(0, steps, steps)
    alphas_cumprod = np.cos(((x / steps) + s) / (1 + s) * np.pi * 0.5) ** 2
    alphas_cumprod = alphas_cumprod / alphas_cumprod[0]
    betas = 1.0 - (alphas_cumprod[1:] / alphas_cumprod[:-1])
    return np.clip(betas, 0.0, 0.999).astype(np.float32)


# ----------------------------------------------------------------------------
# Block-size heuristic
# ----------------------------------------------------------------------------
def _pick_blocks(B, N, itemsize, target_bytes=1 << 20):
    """Choose (batch_block, lane_block, grid_b, grid_n) for (B, N) data.

    Targets ~1 MiB per data tile (so 3 big operands x 2 double-buffers stay
    well under the 32 MiB scoped-VMEM default, including on v7x), keeps block
    dims either equal to the full dim or (8, 128)-aligned, and produces >1 grid
    step whenever the problem is big enough for megacore sharding to matter.
    """
    elems = max(1, target_bytes // itemsize)
    if B * N <= elems:
        return B, N, 1, 1                      # whole arrays in one tile
    if N <= elems:
        nb = N                                 # full lane extent per tile
    else:
        nb = max(128, ((elems // 8) // 128) * 128)   # keep >= 8 rows per tile
        nb = min(nb, N)
    bb = max(1, elems // nb)
    if bb >= B:
        bb = B
    else:
        bb = min(B, max(8, (bb // 8) * 8))     # sublane-aligned partial blocks
    return bb, nb, pl.cdiv(B, bb), pl.cdiv(N, nb)


# ----------------------------------------------------------------------------
# Kernels
# ----------------------------------------------------------------------------
def _combine2_kernel(ca_ref, cb_ref, x_ref, y_ref, o_ref):
    # (Bblk, 1) f32 coefficient columns broadcast against (Bblk, Nblk) tiles.
    out = (ca_ref[...] * x_ref[...].astype(jnp.float32)
           + cb_ref[...] * y_ref[...].astype(jnp.float32))
    o_ref[...] = out.astype(o_ref.dtype)


def _p_mean_variance_kernel(sr_ref, nsrm1_ref, c1_ref, c2_ref, x_ref, eps_ref,
                            mean_ref, *, clip_denoised):
    """Fused: x_recon = sr*x + (-srm1)*eps ; clip ; mean = c1*x_recon + c2*x."""
    x = x_ref[...].astype(jnp.float32)
    eps = eps_ref[...].astype(jnp.float32)
    x_recon = sr_ref[...] * x + nsrm1_ref[...] * eps        # predict_start_from_noise
    if clip_denoised:
        x_recon = jnp.clip(x_recon, -1.0, 1.0)
    mean = c1_ref[...] * x_recon + c2_ref[...] * x           # q_posterior mean
    mean_ref[...] = mean.astype(mean_ref.dtype)


def _coef_elementwise_call(kernel, coef_cols, tensors, out_dtype):
    """Run `kernel(coef_refs..., tensor_refs..., out_ref)` over 2-D (B, N) views.

    coef_cols: list of (B, 1) float32 arrays (per-batch scalars).
    tensors:   list of (B, N) arrays (flattened trajectories).
    """
    B, N = tensors[0].shape
    bb, nb, gb, gn = _pick_blocks(B, N, tensors[0].dtype.itemsize)
    coef_spec = pl.BlockSpec((bb, 1), lambda i, j: (i, 0))
    data_spec = pl.BlockSpec((bb, nb), lambda i, j: (i, j))
    return pl.pallas_call(
        kernel,
        out_shape=jax.ShapeDtypeStruct((B, N), out_dtype),
        grid=(gb, gn),
        in_specs=[coef_spec] * len(coef_cols) + [data_spec] * len(tensors),
        out_specs=data_spec,
        compiler_params=pltpu.CompilerParams(
            dimension_semantics=("parallel", "parallel")),
    )(*coef_cols, *tensors)


def _extract_cols(tables, t):
    """Gather per-batch scalars from small (T,) tables -> list of (B, 1) f32."""
    B = t.shape[0]
    return [tab[t].reshape(B, 1).astype(jnp.float32) for tab in tables]


# ----------------------------------------------------------------------------
# GaussianDiffusion (JAX/Pallas version of the base class)
# ----------------------------------------------------------------------------
class GaussianDiffusion:
    def __init__(self, n_timesteps=20, clip_denoised=True):
        betas = cosine_beta_schedule(n_timesteps)                       # (T,)
        alphas = 1.0 - betas
        alphas_cumprod = np.cumprod(alphas, axis=0)
        alphas_cumprod_prev = np.concatenate(
            [np.ones(1, dtype=np.float32), alphas_cumprod[:-1]])
        self.n_timesteps = int(n_timesteps)
        self.clip_denoised = clip_denoised

        f32 = lambda a: jnp.asarray(a, dtype=jnp.float32)
        self.betas = f32(betas)
        self.alphas_cumprod = f32(alphas_cumprod)
        self.alphas_cumprod_prev = f32(alphas_cumprod_prev)
        self.sqrt_alphas_cumprod = f32(np.sqrt(alphas_cumprod))
        self.sqrt_one_minus_alphas_cumprod = f32(np.sqrt(1.0 - alphas_cumprod))
        self.log_one_minus_alphas_cumprod = f32(np.log(1.0 - alphas_cumprod))
        self.sqrt_recip_alphas_cumprod = f32(np.sqrt(1.0 / alphas_cumprod))
        self.sqrt_recipm1_alphas_cumprod = f32(np.sqrt(1.0 / alphas_cumprod - 1.0))
        # Precomputed once (perf review): avoids re-materializing -table per call.
        self.neg_sqrt_recipm1_alphas_cumprod = -self.sqrt_recipm1_alphas_cumprod

        posterior_variance = betas * (1.0 - alphas_cumprod_prev) / (1.0 - alphas_cumprod)
        self.posterior_variance = f32(posterior_variance)
        self.posterior_log_variance_clipped = f32(
            np.log(np.clip(posterior_variance, 1e-20, None)))
        self.posterior_mean_coef1 = f32(
            betas * np.sqrt(alphas_cumprod_prev) / (1.0 - alphas_cumprod))
        self.posterior_mean_coef2 = f32(
            (1.0 - alphas_cumprod_prev) * np.sqrt(alphas) / (1.0 - alphas_cumprod))

    # ---- helpers -----------------------------------------------------------
    def _clip_t(self, t):
        # Clamp so out-of-range timesteps can never index the tables OOB.
        return jnp.clip(jnp.asarray(t, dtype=jnp.int32), 0, self.n_timesteps - 1)

    # ---- module methods (each a single pallas_call) ------------------------
    def q_sample(self, x_start, t, noise=None):
        if noise is None:
            raise ValueError("pass `noise` explicitly (deterministic JAX port; "
                             "the torch version draws randn_like here)")
        t = self._clip_t(t)
        B = x_start.shape[0]
        cols = _extract_cols(
            [self.sqrt_alphas_cumprod, self.sqrt_one_minus_alphas_cumprod], t)
        out = _coef_elementwise_call(
            _combine2_kernel, cols,
            [x_start.reshape(B, -1), noise.reshape(B, -1)], x_start.dtype)
        return out.reshape(x_start.shape)

    def predict_start_from_noise(self, x_t, t, noise):
        t = self._clip_t(t)
        B = x_t.shape[0]
        cols = _extract_cols(
            [self.sqrt_recip_alphas_cumprod, self.neg_sqrt_recipm1_alphas_cumprod], t)
        out = _coef_elementwise_call(
            _combine2_kernel, cols,
            [x_t.reshape(B, -1), noise.reshape(B, -1)], x_t.dtype)
        return out.reshape(x_t.shape)

    def q_posterior(self, x_start, x_t, t):
        t = self._clip_t(t)
        B = x_t.shape[0]
        cols = _extract_cols(
            [self.posterior_mean_coef1, self.posterior_mean_coef2], t)
        mean = _coef_elementwise_call(
            _combine2_kernel, cols,
            [x_start.reshape(B, -1), x_t.reshape(B, -1)], x_t.dtype
        ).reshape(x_t.shape)
        tail = (1,) * (x_t.ndim - 1)
        var = self.posterior_variance[t].reshape((B,) + tail)
        logvar = self.posterior_log_variance_clipped[t].reshape((B,) + tail)
        return mean, var, logvar

    # ---- fused hot path (perf review item #1) ------------------------------
    def p_mean_variance_from_epsilon(self, x, t, epsilon):
        """Tensor math of `p_mean_variance` once the model produced `epsilon`:
        fused predict_start_from_noise + clip + q_posterior, single HBM pass."""
        t = self._clip_t(t)
        B = x.shape[0]
        cols = _extract_cols(
            [self.sqrt_recip_alphas_cumprod, self.neg_sqrt_recipm1_alphas_cumprod,
             self.posterior_mean_coef1, self.posterior_mean_coef2], t)
        mean = _coef_elementwise_call(
            functools.partial(_p_mean_variance_kernel,
                              clip_denoised=self.clip_denoised),
            cols, [x.reshape(B, -1), epsilon.reshape(B, -1)], x.dtype
        ).reshape(x.shape)
        tail = (1,) * (x.ndim - 1)
        var = self.posterior_variance[t].reshape((B,) + tail)
        logvar = self.posterior_log_variance_clipped[t].reshape((B,) + tail)
        return mean, var, logvar


# ----------------------------------------------------------------------------
# GaussianDiffusion_task_return_conditioned (JAX/Pallas version)
# ----------------------------------------------------------------------------
class GaussianDiffusionTaskReturnConditioned(GaussianDiffusion):
    """Diffusion math runs in Pallas kernels; masks / loss-weights are tiny
    jnp glue (negligible compute, no kernel needed)."""

    def __init__(self, model, horizon, observation_dim, action_dim, task_dim,
                 n_timesteps=20, clip_denoised=True, action_weight=1.0,
                 loss_discount=1.0):
        super().__init__(n_timesteps=n_timesteps, clip_denoised=clip_denoised)
        self.horizon = horizon
        self.observation_dim = observation_dim
        self.action_dim = action_dim
        self.task_dim = task_dim
        self.transition_dim = observation_dim + action_dim + 1 + task_dim
        self.model = model
        self.action_weight = action_weight
        self.loss_discount = loss_discount
        self.loss_weights = self.get_loss_weights(action_weight, loss_discount)
        self.mask_dict = self.get_mask_mode()
        # TODO(synk): p_sample / p_sample_loop / conditional_sample / forward /
        # p_losses / loss require the external denoiser network `self.model`
        # (and a Bernoulli mode sampler); they cannot be ported without it.

    def get_loss_weights(self, action_weight, discount):
        dim_weights = jnp.ones((self.transition_dim,), dtype=jnp.float32)
        discounts = discount ** jnp.arange(self.horizon, dtype=jnp.float32)
        discounts = discounts / discounts.mean()
        loss_weights = jnp.einsum('h,t->ht', discounts, dim_weights)
        a0, a1 = self.observation_dim, self.observation_dim + self.action_dim
        loss_weights = loss_weights.at[0, a0:a1].set(action_weight)
        loss_weights = loss_weights.at[0, :self.observation_dim].set(0.0)
        return loss_weights[None]

    def get_mask_mode(self):
        idx = jnp.arange(self.transition_dim)[None, :]
        mask0 = (idx >= self.transition_dim - self.task_dim).astype(jnp.float32)
        mask0 = jnp.broadcast_to(mask0, (self.horizon, self.transition_dim))
        mask0 = mask0.at[0, :self.observation_dim].set(1.0)
        mask1 = (idx < self.transition_dim - self.task_dim).astype(jnp.float32)
        mask1 = jnp.broadcast_to(mask1, (self.horizon, self.transition_dim))
        return {0: mask0, 1: mask1}

    def get_mask_from_batch(self, mode_batch):
        stacked = jnp.stack([self.mask_dict[0], self.mask_dict[1]])
        return stacked[jnp.asarray(mode_batch, dtype=jnp.int32)]


# ----------------------------------------------------------------------------
# Pure-JAX reference helpers (sanity check only)
# ----------------------------------------------------------------------------
def _ref_extract(a, t, ndim):
    return a[t].reshape((-1,) + (1,) * (ndim - 1))


if __name__ == "__main__":
    # Small shapes consistent with the trajectory diffuser:
    #   transition_dim = observation_dim + action_dim + 1 + task_dim = 16
    #   flattened per-sample row = horizon * transition_dim = 512 lanes.
    B, H = 8, 32
    obs_dim, act_dim, task_dim = 11, 3, 1
    T = 20

    diffusion = GaussianDiffusionTaskReturnConditioned(
        model=None, horizon=H, observation_dim=obs_dim, action_dim=act_dim,
        task_dim=task_dim, n_timesteps=T, clip_denoised=True)
    D = diffusion.transition_dim                    # 16

    key = jax.random.PRNGKey(0)
    k1, k2, k3, k4 = jax.random.split(key, 4)
    x_start = jax.random.normal(k1, (B, H, D), dtype=jnp.float32)
    noise = jax.random.normal(k2, (B, H, D), dtype=jnp.float32)
    t = jax.random.randint(k3, (B,), 0, T, dtype=jnp.int32)
    mode = jax.random.randint(k4, (B,), 0, 2, dtype=jnp.int32)

    # --- Pallas kernels ---
    xt = diffusion.q_sample(x_start, t, noise=noise)
    x0_hat = diffusion.predict_start_from_noise(xt, t, noise)
    mean, var, logvar = diffusion.q_posterior(x0_hat, xt, t)
    mean_f, var_f, logvar_f = diffusion.p_mean_variance_from_epsilon(xt, t, noise)
    mask = diffusion.get_mask_from_batch(mode)
    jax.block_until_ready((xt, x0_hat, mean, var, logvar, mean_f, var_f, logvar_f, mask))

    # --- pure-JAX references ---
    xt_ref = (_ref_extract(diffusion.sqrt_alphas_cumprod, t, 3) * x_start
              + _ref_extract(diffusion.sqrt_one_minus_alphas_cumprod, t, 3) * noise)
    x0_ref = (_ref_extract(diffusion.sqrt_recip_alphas_cumprod, t, 3) * xt
              - _ref_extract(diffusion.sqrt_recipm1_alphas_cumprod, t, 3) * noise)
    mean_ref = (_ref_extract(diffusion.posterior_mean_coef1, t, 3) * x0_hat
                + _ref_extract(diffusion.posterior_mean_coef2, t, 3) * xt)
    x0c_ref = jnp.clip(x0_ref, -1.0, 1.0)
    mean_f_ref = (_ref_extract(diffusion.posterior_mean_coef1, t, 3) * x0c_ref
                  + _ref_extract(diffusion.posterior_mean_coef2, t, 3) * xt)
    var_ref = _ref_extract(diffusion.posterior_variance, t, 3)
    logvar_ref = _ref_extract(diffusion.posterior_log_variance_clipped, t, 3)

    # Tolerances: predict_start / posterior-mean involve a large cancellation
    # (sqrt_recip_alphas_cumprod up to ~13 for T=20), which amplifies benign
    # f32 rounding/FMA differences between the kernel and the unfused XLA
    # reference to ~1e-4; use 2e-3 there and tighter bounds elsewhere.
    np.testing.assert_allclose(np.asarray(xt), np.asarray(xt_ref), rtol=1e-4, atol=1e-4)
    np.testing.assert_allclose(np.asarray(x0_hat), np.asarray(x0_ref), rtol=2e-3, atol=2e-3)
    np.testing.assert_allclose(np.asarray(mean), np.asarray(mean_ref), rtol=2e-3, atol=2e-3)
    np.testing.assert_allclose(np.asarray(mean_f), np.asarray(mean_f_ref), rtol=2e-3, atol=2e-3)
    np.testing.assert_allclose(np.asarray(var), np.asarray(var_ref), rtol=1e-6, atol=0)
    np.testing.assert_allclose(np.asarray(logvar), np.asarray(logvar_ref), rtol=1e-6, atol=0)
    assert var.shape == (B, 1, 1) and logvar.shape == (B, 1, 1)
    assert var_f.shape == (B, 1, 1) and logvar_f.shape == (B, 1, 1)
    assert mask.shape == (B, H, D)

    print("KERNEL_OK")
</pallas_src>

<mosaic_0001>
module attributes {stable_mosaic.version = 11 : i64} {
  func.func @_combine2_kernel(%arg0: i32, %arg1: i32, %arg2: memref<8x1xf32, #tpu.memory_space<vmem>>, %arg3: memref<8x1xf32, #tpu.memory_space<vmem>>, %arg4: memref<8x512xf32, #tpu.memory_space<vmem>>, %arg5: memref<8x512xf32, #tpu.memory_space<vmem>>, %arg6: memref<8x512xf32, #tpu.memory_space<vmem>>) attributes {dimension_semantics = [#tpu.dimension_semantics<parallel>, #tpu.dimension_semantics<parallel>], iteration_bounds = array<i64: 1, 1>, scalar_prefetch = 0 : i64, scratch_operands = 0 : i64, tpu.core_type = #tpu.core_type<tc>, window_params = [{transform_indices = @transform_0, window_bounds = array<i64: 8, 1>}, {transform_indices = @transform_1, window_bounds = array<i64: 8, 1>}, {transform_indices = @transform_2, window_bounds = array<i64: 8, 512>}, {transform_indices = @transform_3, window_bounds = array<i64: 8, 512>}, {transform_indices = @transform_4, window_bounds = array<i64: 8, 512>}]} {
    %c0 = arith.constant 0 : index
    %c0_0 = arith.constant 0 : index
    %0 = vector.load %arg2[%c0, %c0_0] : memref<8x1xf32, #tpu.memory_space<vmem>>, vector<8x1xf32>
    %c0_1 = arith.constant 0 : index
    %c0_2 = arith.constant 0 : index
    %1 = vector.load %arg4[%c0_1, %c0_2] : memref<8x512xf32, #tpu.memory_space<vmem>>, vector<8x512xf32>
    %2 = vector.broadcast %0 : vector<8x1xf32> to vector<8x512xf32>
    %3 = arith.mulf %2, %1 : vector<8x512xf32>
    %c0_3 = arith.constant 0 : index
    %c0_4 = arith.constant 0 : index
    %4 = vector.load %arg3[%c0_3, %c0_4] : memref<8x1xf32, #tpu.memory_space<vmem>>, vector<8x1xf32>
    %c0_5 = arith.constant 0 : index
    %c0_6 = arith.constant 0 : index
    %5 = vector.load %arg5[%c0_5, %c0_6] : memref<8x512xf32, #tpu.memory_space<vmem>>, vector<8x512xf32>
    %6 = vector.broadcast %4 : vector<8x1xf32> to vector<8x512xf32>
    %7 = arith.mulf %6, %5 : vector<8x512xf32>
    %8 = arith.addf %3, %7 : vector<8x512xf32>
    %c0_7 = arith.constant 0 : index
    %c0_8 = arith.constant 0 : index
    %9 = vector.load %arg6[%c0_7, %c0_8] : memref<8x512xf32, #tpu.memory_space<vmem>>, vector<8x512xf32>
    tpu.vector_store %arg6[%c0_7, %c0_8], %8 {strides = array<i32>} : memref<8x512xf32, #tpu.memory_space<vmem>>, vector<8x512xf32>,
    return
  }
  func.func @transform_0(%arg0: i32, %arg1: i32) -> (i32, i32) {
    %c0_i32 = arith.constant 0 : i32
    %c0_i32_0 = arith.constant 0 : i32
    return %arg0, %c0_i32 : i32, i32
  }
  func.func @transform_1(%arg0: i32, %arg1: i32) -> (i32, i32) {
    %c0_i32 = arith.constant 0 : i32
    %c0_i32_0 = arith.constant 0 : i32
    return %arg0, %c0_i32 : i32, i32
  }
  func.func @transform_2(%arg0: i32, %arg1: i32) -> (i32, i32) {
    %c0_i32 = arith.constant 0 : i32
    return %arg0, %arg1 : i32, i32
  }
  func.func @transform_3(%arg0: i32, %arg1: i32) -> (i32, i32) {
    %c0_i32 = arith.constant 0 : i32
    return %arg0, %arg1 : i32, i32
  }
  func.func @transform_4(%arg0: i32, %arg1: i32) -> (i32, i32) {
    %c0_i32 = arith.constant 0 : i32
    return %arg0, %arg1 : i32, i32
  }
}

</mosaic_0001>

<llo_original>
// kernel: tpu_custom_call.1
$region0: #{tpu_custom_call.1}
  #allocation0 [shape = 'u32[]', space=smem, size = 0x4, offset = 0x4, fixed_abs, tag = 'smem constant byte address 0x4 - core index']
  #allocation1 [shape = 'u32[144,128]{1,0:T(1,128)}', space=vmem, size = 0x12000, scoped, tag = 'internal scratch']
  %s0 = inlined_call_operand.vmem [shape: f32[8,1], index: 0, kind: input, shape index: {}]
  %s1 = inlined_call_operand.vmem [shape: f32[8,1], index: 1, kind: input, shape index: {}]
  %s2 = inlined_call_operand.hbm [shape: f32[8,512], index: 2, kind: input, shape index: {}]
  %s3 = inlined_call_operand.hbm [shape: f32[8,512], index: 3, kind: input, shape index: {}]
  %s4 = inlined_call_operand.hbm [shape: f32[8,512], index: 4, kind: output, shape index: {}]
  %s5 = sld [smem:[#allocation0]]
  $region34: #{tpu_custom_call.1} parent=0
    _
  %s7 = ssub.s32 1, %s5
  %s8 = scalar_select 0, %s7, %s5
  $region1: #{tpu_custom_call.1} parent=0
    #allocation2 [shape = 'u8[16384]{0}', space=vmem, size = 0x4000, scoped, tag = 'input window, operand 2, single buffered']
    #allocation3 [shape = 's32[1]{0}', space=sflag, size = 0x4, scoped, tag = 'scoped memory for tpu_custom_call.1']
    #allocation4 [shape = 's32[1]{0}', space=sflag, size = 0x4, scoped, tag = 'scoped memory for tpu_custom_call.1']
    #allocation5 [shape = 'u8[16384]{0}', space=vmem, size = 0x4000, scoped, tag = 'input window, operand 3, single buffered']
    #allocation6 [shape = 's32[1]{0}', space=sflag, size = 0x4, scoped, tag = 'scoped memory for tpu_custom_call.1']
    #allocation7 [shape = 'u8[16384]{0}', space=vmem, size = 0x4000, scoped, tag = 'output window, operand 0, single buffered']
    %9 = vsyncpa [#allocation3], 0
    %10 = vsyncpa [#allocation6], 0
    %11 = vsyncpa [#allocation4], 0
    // Predicated region
    $region2: #{tpu_custom_call.1} parent=1 // pred_check
      _
    $region3: #{tpu_custom_call.1} parent=1 // pred_check_branch
      %13 = sbr.rel (0) target = $region5
    $region4: #{tpu_custom_call.1} parent=1 // pred_region
      _
    $region5: #{tpu_custom_call.1} parent=1 // pred_fallthru
      _
    // Predicated region
    $region6: #{tpu_custom_call.1} parent=1 // pred_check
      _
    $region7: #{tpu_custom_call.1} parent=1 // pred_check_branch
      %15 = sbr.rel (0) target = $region9
    $region8: #{tpu_custom_call.1} parent=1 // pred_region
      _
    $region9: #{tpu_custom_call.1} parent=1 // pred_fallthru
      _
    // Predicated region
    $region10: #{tpu_custom_call.1} parent=1 // pred_check
      _
    $region11: #{tpu_custom_call.1} parent=1 // pred_check_branch
      %17 = sbr.rel (0) target = $region13
    $region12: #{tpu_custom_call.1} parent=1 // pred_region
      %s19 = ssub.s32 512, 512
      %20 = vsyncadd [#allocation3], %s19
      %s22 = sshll.u32 [#allocation2], 4
      %s23 = int_to_ptr.vmem [resolvable:$true] %s22
      %25 = dma.hbm_to_vmem [thread:$0]  %s2, 512, %s23, [#allocation3]
    $region13: #{tpu_custom_call.1} parent=1 // pred_fallthru
      _
    // Predicated region
    $region14: #{tpu_custom_call.1} parent=1 // pred_check
      _
    $region15: #{tpu_custom_call.1} parent=1 // pred_check_branch
      %27 = sbr.rel (0) target = $region17
    $region16: #{tpu_custom_call.1} parent=1 // pred_region
      %s29 = ssub.s32 512, 512
      %30 = vsyncadd [#allocation6], %s29
      %s32 = sshll.u32 [#allocation5], 4
      %s33 = int_to_ptr.vmem [resolvable:$true] %s32
      %35 = dma.hbm_to_vmem [thread:$0]  %s3, 512, %s33, [#allocation6]
    $region17: #{tpu_custom_call.1} parent=1 // pred_fallthru
      _
    // Predicated region
    $region18: #{tpu_custom_call.1} parent=1 // pred_check
      _
    $region19: #{tpu_custom_call.1} parent=1 // pred_check_branch
      %37 = sbr.rel (0) target = $region21
    $region20: #{tpu_custom_call.1} parent=1 // pred_region
      %38 = dma.done [#allocation3], 512
    $region21: #{tpu_custom_call.1} parent=1 // pred_fallthru
      _
    // Predicated region
    $region22: #{tpu_custom_call.1} parent=1 // pred_check
      _
    $region23: #{tpu_custom_call.1} parent=1 // pred_check_branch
      %40 = sbr.rel (0) target = $region25
    $region24: #{tpu_custom_call.1} parent=1 // pred_region
      %41 = dma.done [#allocation6], 512
    $region25: #{tpu_custom_call.1} parent=1 // pred_fallthru
      _
    %v42 = vld [vmem:[%s0] sm:$0xff]
    %v43 = vld [vmem:[#allocation2] sm:$0xff]
    %v44 = vld [vmem:[#allocation2 + $0x8] sm:$0xff]
    %v45 = vld [vmem:[#allocation2 + $0x10] sm:$0xff]
    %v46 = vld [vmem:[#allocation2 + $0x18] sm:$0xff]
    %48 = vset.pattern.permute.xlu0 0
    %49 = vperm.xlu0 %48, %v42
    %v50 = vpop.permute.xlu0 %49
    %v52 = vmul.f32 %v50, %v43
    %v53 = vmul.f32 %v50, %v44
    %v54 = vmul.f32 %v50, %v45
    %v55 = vmul.f32 %v50, %v46
    %v56 = vld [vmem:[%s1] sm:$0xff]
    %v57 = vld [vmem:[#allocation5] sm:$0xff]
    %v58 = vld [vmem:[#allocation5 + $0x8] sm:$0xff]
    %v59 = vld [vmem:[#allocation5 + $0x10] sm:$0xff]
    %v60 = vld [vmem:[#allocation5 + $0x18] sm:$0xff]
    %62 = vset.pattern.permute.xlu0 0
    %63 = vperm.xlu0 %62, %v56
    %v64 = vpop.permute.xlu0 %63
    %v66 = vmul.f32 %v64, %v57
    %v67 = vmul.f32 %v64, %v58
    %v68 = vmul.f32 %v64, %v59
    %v69 = vmul.f32 %v64, %v60
    %v70 = vadd.f32 %v52, %v66
    %v71 = vadd.f32 %v53, %v67
    %v72 = vadd.f32 %v54, %v68
    %v73 = vadd.f32 %v55, %v69
    %74 = vst [vmem:[#allocation7] sm:$0xff] %v70
    %75 = vst [vmem:[#allocation7 + $0x8] sm:$0xff] %v71
    %76 = vst [vmem:[#allocation7 + $0x10] sm:$0xff] %v72
    %77 = vst [vmem:[#allocation7 + $0x18] sm:$0xff] %v73
    // Predicated region
    $region26: #{tpu_custom_call.1} parent=1 // pred_check
      _
    $region27: #{tpu_custom_call.1} parent=1 // pred_check_branch
      %79 = sbr.rel (0) target = $region29
    $region28: #{tpu_custom_call.1} parent=1 // pred_region
      %s81 = ssub.s32 512, 512
      %82 = vsyncadd [#allocation4], %s81
      %s84 = sshll.u32 [#allocation7], 4
      %s85 = int_to_ptr.vmem [resolvable:$true] %s84
      %87 = dma.vmem_to_hbm [thread:$0]  %s85, 512, %s4, [#allocation4]
    $region29: #{tpu_custom_call.1} parent=1 // pred_fallthru
      _
    // Predicated region
    $region30: #{tpu_custom_call.1} parent=1 // pred_check
      _
    $region31: #{tpu_custom_call.1} parent=1 // pred_check_branch
      %89 = sbr.rel (0) target = $region33
    $region32: #{tpu_custom_call.1} parent=1 // pred_region
      %90 = dma.done [#allocation4], 512
    $region33: #{tpu_custom_call.1} parent=1 // pred_fallthru
      _
    %91 = vsyncpa [#allocation3], 1
    %92 = vsyncpa [#allocation6], 1
    %93 = vsyncpa [#allocation4], 1

</llo_original>
